<compile_context>
chip_gen: v7x
topology: tpu7x:2x2x1
jax: 0.10.0
libtpu: 0.0.40
codegen_flags: <defaults>
</compile_context>

<pallas_src>
import math

import jax
import jax.numpy as jnp
from jax.experimental import pallas as pl
from jax.experimental.pallas import tpu as pltpu


# ~4 MiB per x tile; pipeline holds ~4 tile-sized buffers (in+out, double
# buffered) -> ~16 MiB peak.  32 MiB scoped-VMEM limit leaves headroom on
# every generation (v5e/v6e 128 MiB physical, v7x 64 MiB physical).
_TILE_BYTES = 4 << 20
_VMEM_LIMIT_BYTES = 32 << 20


def _drop_path_kernel(x_ref, s_ref, o_ref):
    """o = x * scale, scale broadcast across the lane dimension.

    x_ref : VMEM [rows, lane]  tile of the flattened input
    s_ref : VMEM [rows, 1]     per-row scale (0.0 or 1/keep_prob), f32
    o_ref : VMEM [rows, lane]
    """
    o_ref[...] = (x_ref[...].astype(jnp.float32) * s_ref[...]).astype(o_ref.dtype)


def _pick_lane(F, n_elems):
    """Widest lane width (multiple of 128) dividing F that leaves >= 8 rows."""
    best = None
    for cand in (1024, 512, 256, 128):
        if F % cand == 0:
            if best is None:
                best = cand
            if n_elems // cand >= 8:
                return cand
    return best  # None if F is not a multiple of 128


def drop_path(x, drop_prob=0.0, training=False, key=None, donate=False):
    """JAX/Pallas equivalent of the PyTorch drop_path() function.

    Set donate=True only if the caller donates x's buffer (e.g. via
    jax.jit(..., donate_argnums=...)); otherwise aliasing would force XLA to
    insert a defensive copy and add HBM traffic.
    """
    if drop_prob == 0.0 or not training:
        return x

    keep_prob = 1.0 - float(drop_prob)
    if key is None:
        # TODO(synk): PyTorch uses a stateful global RNG; with no key passed the
        # mask here is deterministic across calls.
        key = jax.random.PRNGKey(0)

    orig_shape = x.shape
    B = x.shape[0]
    F = int(math.prod(x.shape[1:])) if x.ndim > 1 else 1
    itemsize = jnp.dtype(x.dtype).itemsize

    # Per-sample Bernoulli(keep_prob) decision, hoisted out of the kernel:
    #   mask  = floor(keep_prob + U[0,1))   (matches the PyTorch reference)
    #   scale = mask / keep_prob  ->  0.0 (dropped) or 1/keep_prob (kept)
    u = jax.random.uniform(key, (B,), dtype=jnp.float32)
    scale = jnp.floor(keep_prob + u) * jnp.float32(1.0 / keep_prob)

    # Flatten to a lane-dense 2-D slab [B*R, lane]; pad the feature axis to a
    # multiple of 128 if needed (memory-bound pad + slice, keeps the fast path).
    x2 = x.reshape(B, F)
    lane = _pick_lane(F, B * F)
    if lane is None:
        F_used = ((F + 127) // 128) * 128
        x2 = jnp.pad(x2, ((0, 0), (0, F_used - F)))
        lane = _pick_lane(F_used, B * F_used)
    else:
        F_used = F

    R = F_used // lane            # rows per sample (each row belongs to one sample)
    total_rows = B * R
    x_flat = x2.reshape(total_rows, lane)
    scale_rows = jnp.repeat(scale, R).reshape(total_rows, 1)

    # ~4 MiB row-tiles (multiple of 8 sublanes); clamp to the array extent.
    rows = _TILE_BYTES // (lane * itemsize)
    rows = max(8, (rows // 8) * 8)
    if total_rows >= 8:
        rows = min(rows, (total_rows // 8) * 8)
    else:
        rows = total_rows         # block == full extent, still a legal block

    grid = (pl.cdiv(total_rows, rows),)

    cost = pl.CostEstimate(
        flops=B * F,
        transcendentals=0,
        bytes_accessed=2 * B * F * itemsize + total_rows * 4,
    )

    out_flat = pl.pallas_call(
        _drop_path_kernel,
        out_shape=jax.ShapeDtypeStruct((total_rows, lane), x.dtype),
        grid=grid,
        in_specs=[
            pl.BlockSpec((rows, lane), lambda r: (r, 0)),   # x tile
            pl.BlockSpec((rows, 1), lambda r: (r, 0)),      # per-row scale
        ],
        out_specs=pl.BlockSpec((rows, lane), lambda r: (r, 0)),
        input_output_aliases={0: 0} if donate else {},
        compiler_params=pltpu.CompilerParams(
            dimension_semantics=("parallel",),
            vmem_limit_bytes=_VMEM_LIMIT_BYTES,
        ),
        cost_estimate=cost,
    )(x_flat, scale_rows)

    if F_used != F:
        out_flat = out_flat.reshape(B, F_used)[:, :F]
    return out_flat.reshape(orig_shape)


class DropPath:
    """Drop paths per sample (when applied in main path of residual blocks)."""

    def __init__(self, drop_prob=None):
        self.drop_prob = drop_prob
        self.training = True

    def __call__(self, x, key=None):
        return drop_path(x, self.drop_prob, self.training, key=key)


if __name__ == "__main__":
    key = jax.random.PRNGKey(0)
    B, C, H, W = 2, 4, 16, 16
    x = jax.random.normal(key, (B, C, H, W), dtype=jnp.float32)

    module = DropPath(drop_prob=0.25)
    keep_prob = 1.0 - 0.25

    # training=True path (stochastic, runs the Pallas kernel)
    y = module(x, key=jax.random.PRNGKey(42))
    y = jax.block_until_ready(y)
    assert y.shape == x.shape and y.dtype == x.dtype

    # each sample must be either all-zero or x / keep_prob
    for b in range(B):
        yb = y[b]
        ok_keep = bool(jnp.allclose(yb, x[b] / keep_prob, atol=1e-5, rtol=1e-5))
        ok_drop = bool(jnp.allclose(yb, 0.0))
        assert ok_keep or ok_drop

    # non-128-aligned feature dim exercises the pad-and-slice path
    x_odd = jax.random.normal(jax.random.PRNGKey(1), (2, 3, 5), dtype=jnp.float32)
    y_odd = jax.block_until_ready(drop_path(x_odd, 0.25, True, key=jax.random.PRNGKey(7)))
    assert y_odd.shape == x_odd.shape
    for b in range(2):
        ok_keep = bool(jnp.allclose(y_odd[b], x_odd[b] / keep_prob, atol=1e-5, rtol=1e-5))
        ok_drop = bool(jnp.allclose(y_odd[b], 0.0))
        assert ok_keep or ok_drop

    # eval / drop_prob=0 path: identity
    module.training = False
    y_eval = jax.block_until_ready(module(x))
    assert jnp.array_equal(y_eval, x)

    print("KERNEL_OK")
</pallas_src>

<mosaic_0001>
module attributes {stable_mosaic.version = 11 : i64} {
  func.func @_drop_path_kernel(%arg0: i32, %arg1: memref<8x256xf32, #tpu.memory_space<vmem>>, %arg2: memref<8x1xf32, #tpu.memory_space<vmem>>, %arg3: memref<8x256xf32, #tpu.memory_space<vmem>>) attributes {dimension_semantics = [#tpu.dimension_semantics<parallel>], iteration_bounds = array<i64: 1>, scalar_prefetch = 0 : i64, scratch_operands = 0 : i64, tpu.core_type = #tpu.core_type<tc>, window_params = [{transform_indices = @transform_0, window_bounds = array<i64: 8, 256>}, {transform_indices = @transform_1, window_bounds = array<i64: 8, 1>}, {transform_indices = @transform_2, window_bounds = array<i64: 8, 256>}]} {
    %c0 = arith.constant 0 : index
    %c0_0 = arith.constant 0 : index
    %0 = vector.load %arg1[%c0, %c0_0] : memref<8x256xf32, #tpu.memory_space<vmem>>, vector<8x256xf32>
    %c0_1 = arith.constant 0 : index
    %c0_2 = arith.constant 0 : index
    %1 = vector.load %arg2[%c0_1, %c0_2] : memref<8x1xf32, #tpu.memory_space<vmem>>, vector<8x1xf32>
    %2 = vector.broadcast %1 : vector<8x1xf32> to vector<8x256xf32>
    %3 = arith.mulf %0, %2 : vector<8x256xf32>
    %c0_3 = arith.constant 0 : index
    %c0_4 = arith.constant 0 : index
    %4 = vector.load %arg3[%c0_3, %c0_4] : memref<8x256xf32, #tpu.memory_space<vmem>>, vector<8x256xf32>
    tpu.vector_store %arg3[%c0_3, %c0_4], %3 {strides = array<i32>} : memref<8x256xf32, #tpu.memory_space<vmem>>, vector<8x256xf32>,
    return
  }
  func.func @transform_0(%arg0: i32) -> (i32, i32) {
    %c0_i32 = arith.constant 0 : i32
    %c0_i32_0 = arith.constant 0 : i32
    return %arg0, %c0_i32 : i32, i32
  }
  func.func @transform_1(%arg0: i32) -> (i32, i32) {
    %c0_i32 = arith.constant 0 : i32
    %c0_i32_0 = arith.constant 0 : i32
    return %arg0, %c0_i32 : i32, i32
  }
  func.func @transform_2(%arg0: i32) -> (i32, i32) {
    %c0_i32 = arith.constant 0 : i32
    %c0_i32_0 = arith.constant 0 : i32
    return %arg0, %c0_i32 : i32, i32
  }
}

</mosaic_0001>

<llo_original>
// kernel: tpu_custom_call.1
$region0: #{tpu_custom_call.1}
  #allocation0 [shape = 'u32[]', space=smem, size = 0x4, offset = 0x4, fixed_abs, tag = 'smem constant byte address 0x4 - core index']
  #allocation1 [shape = 'u32[144,128]{1,0:T(1,128)}', space=vmem, size = 0x12000, scoped, tag = 'internal scratch']
  %s0 = inlined_call_operand.hbm [shape: f32[8,256], index: 0, kind: input, shape index: {}]
  %s1 = inlined_call_operand.vmem [shape: f32[8,1], index: 1, kind: input, shape index: {}]
  %s2 = inlined_call_operand.hbm [shape: f32[8,256], index: 2, kind: output, shape index: {}]
  %s3 = sld [smem:[#allocation0]]
  $region22: #{tpu_custom_call.1} parent=0
    _
  %s5 = ssub.s32 1, %s3
  %s6 = scalar_select 0, %s5, %s3
  $region1: #{tpu_custom_call.1} parent=0
    #allocation2 [shape = 'u8[8192]{0}', space=vmem, size = 0x2000, scoped, tag = 'input window, operand 0, single buffered']
    #allocation3 [shape = 's32[1]{0}', space=sflag, size = 0x4, scoped, tag = 'scoped memory for tpu_custom_call.1']
    #allocation4 [shape = 's32[1]{0}', space=sflag, size = 0x4, scoped, tag = 'scoped memory for tpu_custom_call.1']
    #allocation5 [shape = 'u8[8192]{0}', space=vmem, size = 0x2000, scoped, tag = 'output window, operand 0, single buffered']
    %7 = vsyncpa [#allocation3], 0
    %8 = vsyncpa [#allocation4], 0
    // Predicated region
    $region2: #{tpu_custom_call.1} parent=1 // pred_check
      _
    $region3: #{tpu_custom_call.1} parent=1 // pred_check_branch
      %10 = sbr.rel (0) target = $region5
    $region4: #{tpu_custom_call.1} parent=1 // pred_region
      %s12 = ssub.s32 256, 256
      %13 = vsyncadd [#allocation3], %s12
      %s15 = sshll.u32 [#allocation2], 4
      %s16 = int_to_ptr.vmem [resolvable:$true] %s15
      %18 = dma.hbm_to_vmem [thread:$0]  %s0, 256, %s16, [#allocation3]
    $region5: #{tpu_custom_call.1} parent=1 // pred_fallthru
      _
    // Predicated region
    $region6: #{tpu_custom_call.1} parent=1 // pred_check
      _
    $region7: #{tpu_custom_call.1} parent=1 // pred_check_branch
      %20 = sbr.rel (0) target = $region9
    $region8: #{tpu_custom_call.1} parent=1 // pred_region
      _
    $region9: #{tpu_custom_call.1} parent=1 // pred_fallthru
      _
    // Predicated region
    $region10: #{tpu_custom_call.1} parent=1 // pred_check
      _
    $region11: #{tpu_custom_call.1} parent=1 // pred_check_branch
      %22 = sbr.rel (0) target = $region13
    $region12: #{tpu_custom_call.1} parent=1 // pred_region
      %23 = dma.done [#allocation3], 256
    $region13: #{tpu_custom_call.1} parent=1 // pred_fallthru
      _
    %v24 = vld [vmem:[#allocation2] sm:$0xff]
    %v25 = vld [vmem:[#allocation2 + $0x8] sm:$0xff]
    %v26 = vld [vmem:[%s1] sm:$0xff]
    %28 = vset.pattern.permute.xlu0 0
    %29 = vperm.xlu0 %28, %v26
    %v30 = vpop.permute.xlu0 %29
    %v32 = vmul.f32 %v24, %v30
    %v33 = vmul.f32 %v25, %v30
    %34 = vst [vmem:[#allocation5] sm:$0xff] %v32
    %35 = vst [vmem:[#allocation5 + $0x8] sm:$0xff] %v33
    // Predicated region
    $region14: #{tpu_custom_call.1} parent=1 // pred_check
      _
    $region15: #{tpu_custom_call.1} parent=1 // pred_check_branch
      %37 = sbr.rel (0) target = $region17
    $region16: #{tpu_custom_call.1} parent=1 // pred_region
      %s39 = ssub.s32 256, 256
      %40 = vsyncadd [#allocation4], %s39
      %s42 = sshll.u32 [#allocation5], 4
      %s43 = int_to_ptr.vmem [resolvable:$true] %s42
      %45 = dma.vmem_to_hbm [thread:$0]  %s43, 256, %s2, [#allocation4]
    $region17: #{tpu_custom_call.1} parent=1 // pred_fallthru
      _
    // Predicated region
    $region18: #{tpu_custom_call.1} parent=1 // pred_check
      _
    $region19: #{tpu_custom_call.1} parent=1 // pred_check_branch
      %47 = sbr.rel (0) target = $region21
    $region20: #{tpu_custom_call.1} parent=1 // pred_region
      %48 = dma.done [#allocation4], 256
    $region21: #{tpu_custom_call.1} parent=1 // pred_fallthru
      _
    %49 = vsyncpa [#allocation3], 1
    %50 = vsyncpa [#allocation4], 1

</llo_original>
